<compile_context>
chip_gen: v7x
topology: tpu7x:2x2x1
jax: 0.10.0
libtpu: 0.0.40
codegen_flags: <defaults>
</compile_context>

<pallas_src>
import functools

import jax
import jax.numpy as jnp
from jax import lax
from jax.experimental import pallas as pl
from jax.experimental.pallas import tpu as pltpu

MARGIN = 0.4
EPS = 1e-6  # PyTorch pairwise_distance eps (added to the signed elementwise difference)


def _round_up(x, m):
    return ((x + m - 1) // m) * m


def _triplet_tile_kernel(a_ref, b_ref, neg_a_ref, neg_b_ref, out_ref,
                         *, tile_rows, tiles_per_part, n_rows):
    """One (tile_rows, D) slab: masked hinge sum accumulated into out_ref."""
    part = pl.program_id(0)   # "parallel" axis (megacore split on v7x)
    step = pl.program_id(1)   # "arbitrary" reduction axis within the slab

    @pl.when(step == 0)
    def _init():
        out_ref[...] = jnp.zeros_like(out_ref)

    a = a_ref[...].astype(jnp.float32)
    b = b_ref[...].astype(jnp.float32)
    na = neg_a_ref[...].astype(jnp.float32)
    nb = neg_b_ref[...].astype(jnp.float32)

    def pdist(x, y):  # PyTorch convention: eps added to the signed difference
        d = x - y + EPS
        return jnp.sqrt(jnp.sum(d * d, axis=-1, keepdims=True))  # (tile_rows, 1)

    # Keep d(a,b) and d(b,a) separate: they differ by the eps sign convention.
    hinge_a = jnp.maximum(pdist(a, b) - pdist(a, nb) + MARGIN, 0.0)
    hinge_b = jnp.maximum(pdist(b, a) - pdist(b, na) + MARGIN, 0.0)

    # Mask padded rows (ragged last tile / slab padding) so they contribute 0.
    base = (part * tiles_per_part + step) * tile_rows
    row = base + lax.broadcasted_iota(jnp.int32, (tile_rows, 1), 0)
    contrib = jnp.where(row < n_rows, hinge_a + hinge_b, 0.0)

    out_ref[...] += jnp.sum(contrib)  # scalar broadcast into the (1,1,128) block


def triplet_loss(a, b, perm_a, perm_b, alpha, *, tile_rows=None):
    """a, b: [N, D]; perm_a, perm_b: [N] int permutations; alpha: [1]. Returns [1]."""
    n, d = a.shape
    itemsize = jnp.dtype(a.dtype).itemsize
    row_bytes = d * itemsize

    # Gather the negatives once in the wrapper (one fused XLA pass).  For small/medium
    # D this beats hundreds of tiny per-row HBM DMAs inside the kernel.
    neg_a = jnp.take(a, perm_a.astype(jnp.int32), axis=0)   # a[perm_a]
    neg_b = jnp.take(b, perm_b.astype(jnp.int32), axis=0)   # b[perm_b]

    # Tile size from an explicit streamed-VMEM budget: 4 inputs x 2 pipeline buffers.
    stream_budget = 24 * 1024 * 1024  # fits v5e/v6e/v7x scoped VMEM comfortably
    max_rows_budget = max(8, stream_budget // (8 * row_bytes))
    if tile_rows is None:
        tile_rows = min(2048, max_rows_budget)
    tile_rows = int(min(int(tile_rows), max_rows_budget, _round_up(n, 8)))
    tile_rows = max(8, (tile_rows // 8) * 8)

    total_tiles = -(-n // tile_rows)
    num_parts = 2 if total_tiles >= 2 else 1          # v7x: 2 TensorCores
    tiles_per_part = -(-total_tiles // num_parts)
    n_pad = num_parts * tiles_per_part * tile_rows

    def pad_rows(x):
        if n_pad == n:
            return x
        return jnp.concatenate([x, jnp.zeros((n_pad - n, d), x.dtype)], axis=0)

    a_p, b_p, na_p, nb_p = (pad_rows(x) for x in (a, b, neg_a, neg_b))

    tile_bytes = tile_rows * row_bytes
    vmem_limit = int(min(48 * 1024 * 1024,                       # safe under v7x 64 MiB
                         max(16 * 1024 * 1024, 8 * tile_bytes + (2 << 20))))

    row_spec = pl.BlockSpec((tile_rows, d),
                            lambda p, t: (p * tiles_per_part + t, 0))

    kernel = functools.partial(_triplet_tile_kernel, tile_rows=tile_rows,
                               tiles_per_part=tiles_per_part, n_rows=n)

    partials = pl.pallas_call(
        kernel,
        out_shape=jax.ShapeDtypeStruct((num_parts, 1, 128), jnp.float32),
        grid_spec=pltpu.PrefetchScalarGridSpec(
            num_scalar_prefetch=0,
            grid=(num_parts, tiles_per_part),
            in_specs=[row_spec, row_spec, row_spec, row_spec],
            out_specs=pl.BlockSpec((1, 1, 128), lambda p, t: (p, 0, 0)),
        ),
        compiler_params=pltpu.CompilerParams(
            dimension_semantics=("parallel", "arbitrary"),
            vmem_limit_bytes=vmem_limit,
        ),
        cost_estimate=pl.CostEstimate(
            flops=int(16 * n_pad * d),
            transcendentals=int(4 * n_pad),
            bytes_accessed=int(4 * n_pad * row_bytes + num_parts * 512),
        ),
    )(a_p, b_p, na_p, nb_p)

    total = jnp.sum(partials[:, 0, 0])                  # add the per-core partials
    return (alpha * (total / n)).reshape((1,))          # alpha * (mean_a + mean_b)


def triplet_loss_ref(a, b, perm_a, perm_b, alpha):
    """Pure-JAX reference mirroring nn.TripletMarginLoss(margin=0.4, p=2)."""
    a = a.astype(jnp.float32)
    b = b.astype(jnp.float32)

    def pdist(x, y):
        return jnp.sqrt(jnp.sum((x - y + EPS) ** 2, axis=-1))

    la = jnp.mean(jnp.maximum(pdist(a, b) - pdist(a, b[perm_b]) + MARGIN, 0.0))
    lb = jnp.mean(jnp.maximum(pdist(b, a) - pdist(b, a[perm_a]) + MARGIN, 0.0))
    return alpha * (la + lb)


if __name__ == "__main__":
    key = jax.random.PRNGKey(0)
    k_a, k_b, k_pa, k_pb = jax.random.split(key, 4)

    N, D = 32, 128  # small embedding batch; feature dim lane-aligned
    a = jax.random.normal(k_a, (N, D), dtype=jnp.float32)
    b = jax.random.normal(k_b, (N, D), dtype=jnp.float32)

    # Deterministic stand-ins for the module's torch.randperm calls.
    perm_a = jax.random.permutation(k_pa, N)
    perm_b = jax.random.permutation(k_pb, N)

    # alpha initialized to 0.0 exactly as in the module's __init__.
    alpha = jnp.zeros((1,), dtype=jnp.float32)
    out = triplet_loss(a, b, perm_a, perm_b, alpha)          # auto tile: grid (1, 1)
    jax.block_until_ready(out)
    ref = triplet_loss_ref(a, b, perm_a, perm_b, alpha)
    assert out.shape == (1,)
    assert jnp.allclose(out, ref, atol=1e-5), (out, ref)

    # Non-zero alpha + forced multi-tile / 2-slab ("parallel" axis) path: grid (2, 2).
    alpha2 = jnp.array([1.5], dtype=jnp.float32)
    out2 = triplet_loss(a, b, perm_a, perm_b, alpha2, tile_rows=8)
    jax.block_until_ready(out2)
    ref2 = triplet_loss_ref(a, b, perm_a, perm_b, alpha2)
    assert jnp.allclose(out2, ref2, atol=1e-5), (out2, ref2)

    # bf16 streaming path: native bf16 tiles, f32 math in-kernel.
    a16 = a.astype(jnp.bfloat16)
    b16 = b.astype(jnp.bfloat16)
    out3 = triplet_loss(a16, b16, perm_a, perm_b, alpha2)
    jax.block_until_ready(out3)
    ref3 = triplet_loss_ref(a16, b16, perm_a, perm_b, alpha2)
    assert jnp.allclose(out3, ref3, atol=1e-4), (out3, ref3)

    print("KERNEL_OK")
</pallas_src>

<mosaic_0001>
module attributes {stable_mosaic.version = 11 : i64} {
  func.func @_triplet_tile_kernel(%arg0: i32, %arg1: i32, %arg2: memref<32x128xf32, #tpu.memory_space<vmem>>, %arg3: memref<32x128xf32, #tpu.memory_space<vmem>>, %arg4: memref<32x128xf32, #tpu.memory_space<vmem>>, %arg5: memref<32x128xf32, #tpu.memory_space<vmem>>, %arg6: memref<1x1x128xf32, #tpu.memory_space<vmem>>) attributes {dimension_semantics = [#tpu.dimension_semantics<parallel>, #tpu.dimension_semantics<arbitrary>], iteration_bounds = array<i64: 1, 1>, scalar_prefetch = 0 : i64, scratch_operands = 0 : i64, tpu.core_type = #tpu.core_type<tc>, window_params = [{transform_indices = @transform_0, window_bounds = array<i64: 32, 128>}, {transform_indices = @transform_1, window_bounds = array<i64: 32, 128>}, {transform_indices = @transform_2, window_bounds = array<i64: 32, 128>}, {transform_indices = @transform_3, window_bounds = array<i64: 32, 128>}, {transform_indices = @transform_4, window_bounds = array<i64: 1, 1, 128>}]} {
    %c0_i32 = arith.constant 0 : i32
    %0 = arith.cmpi eq, %arg1, %c0_i32 : i32
    %1 = arith.extui %0 : i1 to i32
    %c0_i32_0 = arith.constant 0 : i32
    %2 = arith.cmpi ne, %1, %c0_i32_0 : i32
    scf.if %2 {
      %cst_28 = arith.constant 0.000000e+00 : f32
      %64 = vector.broadcast %cst_28 : f32 to vector<1x1x128xf32>
      %c0_29 = arith.constant 0 : index
      %c0_30 = arith.constant 0 : index
      %c0_31 = arith.constant 0 : index
      %65 = vector.load %arg6[%c0_29, %c0_30, %c0_31] : memref<1x1x128xf32, #tpu.memory_space<vmem>>, vector<1x1x128xf32>
      tpu.vector_store %arg6[%c0_29, %c0_30, %c0_31], %64 {strides = array<i32>} : memref<1x1x128xf32, #tpu.memory_space<vmem>>, vector<1x1x128xf32>,
    } else {
    }
    %c0 = arith.constant 0 : index
    %c0_1 = arith.constant 0 : index
    %3 = vector.load %arg2[%c0, %c0_1] : memref<32x128xf32, #tpu.memory_space<vmem>>, vector<32x128xf32>
    %c0_2 = arith.constant 0 : index
    %c0_3 = arith.constant 0 : index
    %4 = vector.load %arg3[%c0_2, %c0_3] : memref<32x128xf32, #tpu.memory_space<vmem>>, vector<32x128xf32>
    %c0_4 = arith.constant 0 : index
    %c0_5 = arith.constant 0 : index
    %5 = vector.load %arg4[%c0_4, %c0_5] : memref<32x128xf32, #tpu.memory_space<vmem>>, vector<32x128xf32>
    %c0_6 = arith.constant 0 : index
    %c0_7 = arith.constant 0 : index
    %6 = vector.load %arg5[%c0_6, %c0_7] : memref<32x128xf32, #tpu.memory_space<vmem>>, vector<32x128xf32>
    %7 = arith.subf %3, %4 : vector<32x128xf32>
    %cst = arith.constant 9.99999997E-7 : f32
    %8 = vector.broadcast %cst : f32 to vector<32x128xf32>
    %9 = arith.addf %7, %8 : vector<32x128xf32>
    %10 = arith.mulf %9, %9 : vector<32x128xf32>
    %cst_8 = arith.constant dense<0.000000e+00> : vector<32xf32>
    %11 = vector.multi_reduction <add>, %10, %cst_8 [1] : vector<32x128xf32> to vector<32xf32>
    %12 = vector.shape_cast %11 : vector<32xf32> to vector<32x1xf32>
    %13 = math.sqrt %12 : vector<32x1xf32>
    %14 = arith.subf %3, %6 : vector<32x128xf32>
    %cst_9 = arith.constant 9.99999997E-7 : f32
    %15 = vector.broadcast %cst_9 : f32 to vector<32x128xf32>
    %16 = arith.addf %14, %15 : vector<32x128xf32>
    %17 = arith.mulf %16, %16 : vector<32x128xf32>
    %cst_10 = arith.constant dense<0.000000e+00> : vector<32xf32>
    %18 = vector.multi_reduction <add>, %17, %cst_10 [1] : vector<32x128xf32> to vector<32xf32>
    %19 = vector.shape_cast %18 : vector<32xf32> to vector<32x1xf32>
    %20 = math.sqrt %19 : vector<32x1xf32>
    %21 = arith.subf %13, %20 : vector<32x1xf32>
    %cst_11 = arith.constant 4.000000e-01 : f32
    %22 = vector.broadcast %cst_11 : f32 to vector<32x1xf32>
    %23 = arith.addf %21, %22 : vector<32x1xf32>
    %cst_12 = arith.constant 0.000000e+00 : f32
    %24 = vector.broadcast %cst_12 : f32 to vector<32x1xf32>
    %25 = arith.maximumf %23, %24 : vector<32x1xf32>
    %26 = arith.subf %4, %3 : vector<32x128xf32>
    %cst_13 = arith.constant 9.99999997E-7 : f32
    %27 = vector.broadcast %cst_13 : f32 to vector<32x128xf32>
    %28 = arith.addf %26, %27 : vector<32x128xf32>
    %29 = arith.mulf %28, %28 : vector<32x128xf32>
    %cst_14 = arith.constant dense<0.000000e+00> : vector<32xf32>
    %30 = vector.multi_reduction <add>, %29, %cst_14 [1] : vector<32x128xf32> to vector<32xf32>
    %31 = vector.shape_cast %30 : vector<32xf32> to vector<32x1xf32>
    %32 = math.sqrt %31 : vector<32x1xf32>
    %33 = arith.subf %4, %5 : vector<32x128xf32>
    %cst_15 = arith.constant 9.99999997E-7 : f32
    %34 = vector.broadcast %cst_15 : f32 to vector<32x128xf32>
    %35 = arith.addf %33, %34 : vector<32x128xf32>
    %36 = arith.mulf %35, %35 : vector<32x128xf32>
    %cst_16 = arith.constant dense<0.000000e+00> : vector<32xf32>
    %37 = vector.multi_reduction <add>, %36, %cst_16 [1] : vector<32x128xf32> to vector<32xf32>
    %38 = vector.shape_cast %37 : vector<32xf32> to vector<32x1xf32>
    %39 = math.sqrt %38 : vector<32x1xf32>
    %40 = arith.subf %32, %39 : vector<32x1xf32>
    %cst_17 = arith.constant 4.000000e-01 : f32
    %41 = vector.broadcast %cst_17 : f32 to vector<32x1xf32>
    %42 = arith.addf %40, %41 : vector<32x1xf32>
    %cst_18 = arith.constant 0.000000e+00 : f32
    %43 = vector.broadcast %cst_18 : f32 to vector<32x1xf32>
    %44 = arith.maximumf %42, %43 : vector<32x1xf32>
    %c1_i32 = arith.constant 1 : i32
    %45 = arith.muli %arg0, %c1_i32 : i32
    %46 = arith.addi %45, %arg1 : i32
    %c32_i32 = arith.constant 32 : i32
    %47 = arith.muli %46, %c32_i32 : i32
    %48 = tpu.iota {dimensions = array<i32: 0>} : vector<32x1xi32>
    %49 = vector.broadcast %47 : i32 to vector<32x1xi32>
    %50 = arith.addi %49, %48 : vector<32x1xi32>
    %c32_i32_19 = arith.constant 32 : i32
    %51 = vector.broadcast %c32_i32_19 : i32 to vector<32x1xi32>
    %52 = arith.cmpi slt, %50, %51 : vector<32x1xi32>
    %53 = arith.addf %25, %44 : vector<32x1xf32>
    %cst_20 = arith.constant 0.000000e+00 : f32
    %54 = vector.broadcast %cst_20 : f32 to vector<32x1xf32>
    %55 = arith.select %52, %53, %54 : vector<32x1xi1>, vector<32x1xf32>
    %c0_21 = arith.constant 0 : index
    %c0_22 = arith.constant 0 : index
    %c0_23 = arith.constant 0 : index
    %56 = vector.load %arg6[%c0_21, %c0_22, %c0_23] : memref<1x1x128xf32, #tpu.memory_space<vmem>>, vector<1x1x128xf32>
    %57 = vector.shape_cast %55 : vector<32x1xf32> to vector<1x32x1xf32>
    %cst_24 = arith.constant dense<0.000000e+00> : vector<1xf32>
    %58 = vector.multi_reduction <add>, %57, %cst_24 [1, 2] : vector<1x32x1xf32> to vector<1xf32>
    %59 = vector.shape_cast %58 : vector<1xf32> to vector<1x1x1xf32>
    %60 = vector.extract %59[0, 0, 0] : f32 from vector<1x1x1xf32>
    %61 = vector.broadcast %60 : f32 to vector<1x1x128xf32>
    %62 = arith.addf %56, %61 : vector<1x1x128xf32>
    %c0_25 = arith.constant 0 : index
    %c0_26 = arith.constant 0 : index
    %c0_27 = arith.constant 0 : index
    %63 = vector.load %arg6[%c0_25, %c0_26, %c0_27] : memref<1x1x128xf32, #tpu.memory_space<vmem>>, vector<1x1x128xf32>
    tpu.vector_store %arg6[%c0_25, %c0_26, %c0_27], %62 {strides = array<i32>} : memref<1x1x128xf32, #tpu.memory_space<vmem>>, vector<1x1x128xf32>,
    return
  }
  func.func @transform_0(%arg0: i32, %arg1: i32) -> (i32, i32) {
    %c1_i32 = arith.constant 1 : i32
    %0 = arith.muli %arg0, %c1_i32 : i32
    %1 = arith.addi %0, %arg1 : i32
    %c0_i32 = arith.constant 0 : i32
    %c0_i32_0 = arith.constant 0 : i32
    return %1, %c0_i32 : i32, i32
  }
  func.func @transform_1(%arg0: i32, %arg1: i32) -> (i32, i32) {
    %c1_i32 = arith.constant 1 : i32
    %0 = arith.muli %arg0, %c1_i32 : i32
    %1 = arith.addi %0, %arg1 : i32
    %c0_i32 = arith.constant 0 : i32
    %c0_i32_0 = arith.constant 0 : i32
    return %1, %c0_i32 : i32, i32
  }
  func.func @transform_2(%arg0: i32, %arg1: i32) -> (i32, i32) {
    %c1_i32 = arith.constant 1 : i32
    %0 = arith.muli %arg0, %c1_i32 : i32
    %1 = arith.addi %0, %arg1 : i32
    %c0_i32 = arith.constant 0 : i32
    %c0_i32_0 = arith.constant 0 : i32
    return %1, %c0_i32 : i32, i32
  }
  func.func @transform_3(%arg0: i32, %arg1: i32) -> (i32, i32) {
    %c1_i32 = arith.constant 1 : i32
    %0 = arith.muli %arg0, %c1_i32 : i32
    %1 = arith.addi %0, %arg1 : i32
    %c0_i32 = arith.constant 0 : i32
    %c0_i32_0 = arith.constant 0 : i32
    return %1, %c0_i32 : i32, i32
  }
  func.func @transform_4(%arg0: i32, %arg1: i32) -> (i32, i32, i32) {
    %c0_i32 = arith.constant 0 : i32
    %c0_i32_0 = arith.constant 0 : i32
    %c0_i32_1 = arith.constant 0 : i32
    return %arg0, %c0_i32, %c0_i32_0 : i32, i32, i32
  }
}

</mosaic_0001>

<llo_original>
// kernel: tpu_custom_call.1
$region0: #{tpu_custom_call.1}
  #allocation0 [shape = 'u32[]', space=smem, size = 0x4, offset = 0x4, fixed_abs, tag = 'smem constant byte address 0x4 - core index']
  #allocation1 [shape = 'u32[144,128]{1,0:T(1,128)}', space=vmem, size = 0x12000, scoped, tag = 'internal scratch']
  %s0 = inlined_call_operand.hbm [shape: f32[32,128], index: 0, kind: input, shape index: {}]
  %s1 = inlined_call_operand.hbm [shape: f32[32,128], index: 1, kind: input, shape index: {}]
  %s2 = inlined_call_operand.hbm [shape: f32[32,128], index: 2, kind: input, shape index: {}]
  %s3 = inlined_call_operand.hbm [shape: f32[32,128], index: 3, kind: input, shape index: {}]
  %s4 = inlined_call_operand.hbm [shape: f32[1,1,128], index: 4, kind: output, shape index: {}]
  %s5 = sld [smem:[#allocation0]]
  $region46: #{tpu_custom_call.1} parent=0
    _
  %s7 = ssub.s32 1, %s5
  %s8 = scalar_select 0, %s7, %s5
  $region1: #{tpu_custom_call.1} parent=0
    #allocation2 [shape = 'u8[16384]{0}', space=vmem, size = 0x4000, scoped, tag = 'input window, operand 0, single buffered']
    #allocation3 [shape = 's32[1]{0}', space=sflag, size = 0x4, scoped, tag = 'scoped memory for tpu_custom_call.1']
    #allocation4 [shape = 's32[1]{0}', space=sflag, size = 0x4, scoped, tag = 'scoped memory for tpu_custom_call.1']
    #allocation5 [shape = 'u8[16384]{0}', space=vmem, size = 0x4000, scoped, tag = 'input window, operand 1, single buffered']
    #allocation6 [shape = 's32[1]{0}', space=sflag, size = 0x4, scoped, tag = 'scoped memory for tpu_custom_call.1']
    #allocation7 [shape = 'u8[16384]{0}', space=vmem, size = 0x4000, scoped, tag = 'input window, operand 2, single buffered']
    #allocation8 [shape = 'u8[16384]{0}', space=vmem, size = 0x4000, scoped, tag = 'input window, operand 3, single buffered']
    #allocation9 [shape = 's32[1]{0}', space=sflag, size = 0x4, scoped, tag = 'scoped memory for tpu_custom_call.1']
    #allocation10 [shape = 'u8[512]{0}', space=vmem, size = 0x400, scoped, tag = 'output window, operand 0, single buffered']
    %9 = vsyncpa [#allocation3], 0
    %10 = vsyncpa [#allocation6], 0
    %11 = vsyncpa [#allocation9], 0
    %12 = vsyncpa [#allocation4], 0
    // Predicated region
    $region2: #{tpu_custom_call.1} parent=1 // pred_check
      _
    $region3: #{tpu_custom_call.1} parent=1 // pred_check_branch
      %14 = sbr.rel (0) target = $region5
    $region4: #{tpu_custom_call.1} parent=1 // pred_region
      %s15 = sadd.s32 0, 0
      %s16 = smul.u32 4, %s15
      %s18 = ssub.s32 512, 512
      %19 = vsyncadd [#allocation3], %s18
      %s20 = smul.addr %s16, 128
      %s21 = scalar_lea.hbm %s0, %s20
      %s22 = sshll.u32 [#allocation2], 4
      %s23 = int_to_ptr.vmem [resolvable:$true] %s22
      %28 = dma.hbm_to_vmem [thread:$0]  %s21, 512, %s23, [#allocation3], 128, 128, 8
    $region5: #{tpu_custom_call.1} parent=1 // pred_fallthru
      _
    // Predicated region
    $region6: #{tpu_custom_call.1} parent=1 // pred_check
      _
    $region7: #{tpu_custom_call.1} parent=1 // pred_check_branch
      %30 = sbr.rel (0) target = $region9
    $region8: #{tpu_custom_call.1} parent=1 // pred_region
      %s31 = sadd.s32 0, 0
      %s32 = smul.u32 4, %s31
      %s34 = ssub.s32 512, 512
      %35 = vsyncadd [#allocation6], %s34
      %s36 = smul.addr %s32, 128
      %s37 = scalar_lea.hbm %s1, %s36
      %s38 = sshll.u32 [#allocation5], 4
      %s39 = int_to_ptr.vmem [resolvable:$true] %s38
      %44 = dma.hbm_to_vmem [thread:$0]  %s37, 512, %s39, [#allocation6], 128, 128, 8
    $region9: #{tpu_custom_call.1} parent=1 // pred_fallthru
      _
    // Predicated region
    $region10: #{tpu_custom_call.1} parent=1 // pred_check
      _
    $region11: #{tpu_custom_call.1} parent=1 // pred_check_branch
      %46 = sbr.rel (0) target = $region13
    $region12: #{tpu_custom_call.1} parent=1 // pred_region
      %s47 = sadd.s32 0, 0
      %s48 = smul.u32 4, %s47
      %s50 = ssub.s32 512, 512
      %51 = vsyncadd [#allocation6], %s50
      %s52 = smul.addr %s48, 128
      %s53 = scalar_lea.hbm %s2, %s52
      %s54 = sshll.u32 [#allocation7], 4
      %s55 = int_to_ptr.vmem [resolvable:$true] %s54
      %60 = dma.hbm_to_vmem [thread:$0]  %s53, 512, %s55, [#allocation6], 128, 128, 8
    $region13: #{tpu_custom_call.1} parent=1 // pred_fallthru
      _
    // Predicated region
    $region14: #{tpu_custom_call.1} parent=1 // pred_check
      _
    $region15: #{tpu_custom_call.1} parent=1 // pred_check_branch
      %62 = sbr.rel (0) target = $region17
    $region16: #{tpu_custom_call.1} parent=1 // pred_region
      %s63 = sadd.s32 0, 0
      %s64 = smul.u32 4, %s63
      %s66 = ssub.s32 512, 512
      %67 = vsyncadd [#allocation9], %s66
      %s68 = smul.addr %s64, 128
      %s69 = scalar_lea.hbm %s3, %s68
      %s70 = sshll.u32 [#allocation8], 4
      %s71 = int_to_ptr.vmem [resolvable:$true] %s70
      %76 = dma.hbm_to_vmem [thread:$0]  %s69, 512, %s71, [#allocation9], 128, 128, 8
    $region17: #{tpu_custom_call.1} parent=1 // pred_fallthru
      _
    // Predicated region
    $region18: #{tpu_custom_call.1} parent=1 // pred_check
      _
    $region19: #{tpu_custom_call.1} parent=1 // pred_check_branch
      %78 = sbr.rel (0) target = $region21
    $region20: #{tpu_custom_call.1} parent=1 // pred_region
      %79 = dma.done [#allocation3], 512
    $region21: #{tpu_custom_call.1} parent=1 // pred_fallthru
      _
    // Predicated region
    $region22: #{tpu_custom_call.1} parent=1 // pred_check
      _
    $region23: #{tpu_custom_call.1} parent=1 // pred_check_branch
      %81 = sbr.rel (0) target = $region25
    $region24: #{tpu_custom_call.1} parent=1 // pred_region
      %82 = dma.done [#allocation6], 512
    $region25: #{tpu_custom_call.1} parent=1 // pred_fallthru
      _
    // Predicated region
    $region26: #{tpu_custom_call.1} parent=1 // pred_check
      _
    $region27: #{tpu_custom_call.1} parent=1 // pred_check_branch
      %84 = sbr.rel (0) target = $region29
    $region28: #{tpu_custom_call.1} parent=1 // pred_region
      %85 = dma.done [#allocation6], 512
    $region29: #{tpu_custom_call.1} parent=1 // pred_fallthru
      _
    // Predicated region
    $region30: #{tpu_custom_call.1} parent=1 // pred_check
      _
    $region31: #{tpu_custom_call.1} parent=1 // pred_check_branch
      %87 = sbr.rel (0) target = $region33
    $region32: #{tpu_custom_call.1} parent=1 // pred_region
      %88 = dma.done [#allocation9], 512
    $region33: #{tpu_custom_call.1} parent=1 // pred_fallthru
      _
    %s89 = sadd.s32 0, 0
    %s90 = smul.u32 4, %s89
    %s91 = sadd.s32 0, 0
    %s92 = smul.u32 4, %s91
    %s93 = sadd.s32 0, 0
    %s94 = smul.u32 4, %s93
    %s95 = sadd.s32 0, 0
    %s96 = smul.u32 4, %s95
    %p97 = scmp.eq.s32.totalorder 0, 0
    // Predicated region
    $region34: #{tpu_custom_call.1} parent=1 // pred_check
      %p98 = pneg %p97
    $region35: #{tpu_custom_call.1} parent=1 // pred_check_branch
      %100 = sbr.rel (%p98) target = $region37
    $region36: #{tpu_custom_call.1} parent=1 // pred_region
      %101 = vst [vmem:[#allocation10] sm:$0x1] 0.0
    $region37: #{tpu_custom_call.1} parent=1 // pred_fallthru
      _
    %v102 = vld [vmem:[#allocation2] sm:$0xff]
    %v103 = vld [vmem:[#allocation2 + $0x8] sm:$0xff]
    %v104 = vld [vmem:[#allocation2 + $0x10] sm:$0xff]
    %v105 = vld [vmem:[#allocation2 + $0x18] sm:$0xff]
    %v106 = vld [vmem:[#allocation5] sm:$0xff]
    %v107 = vld [vmem:[#allocation5 + $0x8] sm:$0xff]
    %v108 = vld [vmem:[#allocation5 + $0x10] sm:$0xff]
    %v109 = vld [vmem:[#allocation5 + $0x18] sm:$0xff]
    %v110 = vld [vmem:[#allocation7] sm:$0xff]
    %v111 = vld [vmem:[#allocation7 + $0x8] sm:$0xff]
    %v112 = vld [vmem:[#allocation7 + $0x10] sm:$0xff]
    %v113 = vld [vmem:[#allocation7 + $0x18] sm:$0xff]
    %v114 = vld [vmem:[#allocation8] sm:$0xff]
    %v115 = vld [vmem:[#allocation8 + $0x8] sm:$0xff]
    %v116 = vld [vmem:[#allocation8 + $0x10] sm:$0xff]
    %v117 = vld [vmem:[#allocation8 + $0x18] sm:$0xff]
    %v118 = vsub.f32 %v102, %v106
    %v119 = vsub.f32 %v103, %v107
    %v120 = vsub.f32 %v104, %v108
    %v121 = vsub.f32 %v105, %v109
    %v122 = vadd.f32 %v118, 1e-06
    %v123 = vadd.f32 %v119, 1e-06
    %v124 = vadd.f32 %v120, 1e-06
    %v125 = vadd.f32 %v121, 1e-06
    %v126 = vmul.f32 %v122, %v122
    %v127 = vmul.f32 %v123, %v123
    %v128 = vmul.f32 %v124, %v124
    %v129 = vmul.f32 %v125, %v125
    %130 = vadd.xlane.f32.xlu0 %v126
    %v131 = vpop.xlane.xlu0 %130
    %132 = vadd.xlane.f32.xlu0 %v127
    %v133 = vpop.xlane.xlu0 %132
    %134 = vadd.xlane.f32.xlu0 %v128
    %v135 = vpop.xlane.xlu0 %134
    %136 = vadd.xlane.f32.xlu0 %v129
    %v137 = vpop.xlane.xlu0 %136
    %v138 = vrsqrt.pop %v131
    %v139 = vmul.f32 %v131, %v138
    %vm140 = vcmp.eq.f32.partialorder %v131, inf
    %v141 = vsel %vm140, %v131, %v139
    %vm142 = vcmp.eq.f32.partialorder %v131, 0.0
    %v143 = vand.u32 %v131, 2147483648
    %v144 = vsel %vm142, %v143, %v141
    %v145 = vrsqrt.pop %v133
    %v146 = vmul.f32 %v133, %v145
    %vm147 = vcmp.eq.f32.partialorder %v133, inf
    %v148 = vsel %vm147, %v133, %v146
    %vm149 = vcmp.eq.f32.partialorder %v133, 0.0
    %v150 = vand.u32 %v133, 2147483648
    %v151 = vsel %vm149, %v150, %v148
    %v152 = vrsqrt.pop %v135
    %v153 = vmul.f32 %v135, %v152
    %vm154 = vcmp.eq.f32.partialorder %v135, inf
    %v155 = vsel %vm154, %v135, %v153
    %vm156 = vcmp.eq.f32.partialorder %v135, 0.0
    %v157 = vand.u32 %v135, 2147483648
    %v158 = vsel %vm156, %v157, %v155
    %v159 = vrsqrt.pop %v137
    %v160 = vmul.f32 %v137, %v159
    %vm161 = vcmp.eq.f32.partialorder %v137, inf
    %v162 = vsel %vm161, %v137, %v160
    %vm163 = vcmp.eq.f32.partialorder %v137, 0.0
    %v164 = vand.u32 %v137, 2147483648
    %v165 = vsel %vm163, %v164, %v162
    %v166 = vsub.f32 %v102, %v114
    %v167 = vsub.f32 %v103, %v115
    %v168 = vsub.f32 %v104, %v116
    %v169 = vsub.f32 %v105, %v117
    %v170 = vadd.f32 %v166, 1e-06
    %v171 = vadd.f32 %v167, 1e-06
    %v172 = vadd.f32 %v168, 1e-06
    %v173 = vadd.f32 %v169, 1e-06
    %v174 = vmul.f32 %v170, %v170
    %v175 = vmul.f32 %v171, %v171
    %v176 = vmul.f32 %v172, %v172
    %v177 = vmul.f32 %v173, %v173
    %178 = vadd.xlane.f32.xlu0 %v174
    %v179 = vpop.xlane.xlu0 %178
    %180 = vadd.xlane.f32.xlu0 %v175
    %v181 = vpop.xlane.xlu0 %180
    %182 = vadd.xlane.f32.xlu0 %v176
    %v183 = vpop.xlane.xlu0 %182
    %184 = vadd.xlane.f32.xlu0 %v177
    %v185 = vpop.xlane.xlu0 %184
    %v186 = vrsqrt.pop %v179
    %v187 = vmul.f32 %v179, %v186
    %vm188 = vcmp.eq.f32.partialorder %v179, inf
    %v189 = vsel %vm188, %v179, %v187
    %vm190 = vcmp.eq.f32.partialorder %v179, 0.0
    %v191 = vand.u32 %v179, 2147483648
    %v192 = vsel %vm190, %v191, %v189
    %v193 = vrsqrt.pop %v181
    %v194 = vmul.f32 %v181, %v193
    %vm195 = vcmp.eq.f32.partialorder %v181, inf
    %v196 = vsel %vm195, %v181, %v194
    %vm197 = vcmp.eq.f32.partialorder %v181, 0.0
    %v198 = vand.u32 %v181, 2147483648
    %v199 = vsel %vm197, %v198, %v196
    %v200 = vrsqrt.pop %v183
    %v201 = vmul.f32 %v183, %v200
    %vm202 = vcmp.eq.f32.partialorder %v183, inf
    %v203 = vsel %vm202, %v183, %v201
    %vm204 = vcmp.eq.f32.partialorder %v183, 0.0
    %v205 = vand.u32 %v183, 2147483648
    %v206 = vsel %vm204, %v205, %v203
    %v207 = vrsqrt.pop %v185
    %v208 = vmul.f32 %v185, %v207
    %vm209 = vcmp.eq.f32.partialorder %v185, inf
    %v210 = vsel %vm209, %v185, %v208
    %vm211 = vcmp.eq.f32.partialorder %v185, 0.0
    %v212 = vand.u32 %v185, 2147483648
    %v213 = vsel %vm211, %v212, %v210
    %v214 = vsub.f32 %v144, %v192
    %v215 = vsub.f32 %v151, %v199
    %v216 = vsub.f32 %v158, %v206
    %v217 = vsub.f32 %v165, %v213
    %v218 = vadd.f32 %v214, 0.4
    %v219 = vadd.f32 %v215, 0.4
    %v220 = vadd.f32 %v216, 0.4
    %v221 = vadd.f32 %v217, 0.4
    %v222 = vmax.f32 %v218, 0.0
    %v223 = vmax.f32 %v219, 0.0
    %v224 = vmax.f32 %v220, 0.0
    %v225 = vmax.f32 %v221, 0.0
    %v226 = vsub.f32 %v106, %v102
    %v227 = vsub.f32 %v107, %v103
    %v228 = vsub.f32 %v108, %v104
    %v229 = vsub.f32 %v109, %v105
    %v230 = vadd.f32 %v226, 1e-06
    %v231 = vadd.f32 %v227, 1e-06
    %v232 = vadd.f32 %v228, 1e-06
    %v233 = vadd.f32 %v229, 1e-06
    %v234 = vmul.f32 %v230, %v230
    %v235 = vmul.f32 %v231, %v231
    %v236 = vmul.f32 %v232, %v232
    %v237 = vmul.f32 %v233, %v233
    %238 = vadd.xlane.f32.xlu0 %v234
    %v239 = vpop.xlane.xlu0 %238
    %240 = vadd.xlane.f32.xlu0 %v235
    %v241 = vpop.xlane.xlu0 %240
    %242 = vadd.xlane.f32.xlu0 %v236
    %v243 = vpop.xlane.xlu0 %242
    %244 = vadd.xlane.f32.xlu0 %v237
    %v245 = vpop.xlane.xlu0 %244
    %v246 = vrsqrt.pop %v239
    %v247 = vmul.f32 %v239, %v246
    %vm248 = vcmp.eq.f32.partialorder %v239, inf
    %v249 = vsel %vm248, %v239, %v247
    %vm250 = vcmp.eq.f32.partialorder %v239, 0.0
    %v251 = vand.u32 %v239, 2147483648
    %v252 = vsel %vm250, %v251, %v249
    %v253 = vrsqrt.pop %v241
    %v254 = vmul.f32 %v241, %v253
    %vm255 = vcmp.eq.f32.partialorder %v241, inf
    %v256 = vsel %vm255, %v241, %v254
    %vm257 = vcmp.eq.f32.partialorder %v241, 0.0
    %v258 = vand.u32 %v241, 2147483648
    %v259 = vsel %vm257, %v258, %v256
    %v260 = vrsqrt.pop %v243
    %v261 = vmul.f32 %v243, %v260
    %vm262 = vcmp.eq.f32.partialorder %v243, inf
    %v263 = vsel %vm262, %v243, %v261
    %vm264 = vcmp.eq.f32.partialorder %v243, 0.0
    %v265 = vand.u32 %v243, 2147483648
    %v266 = vsel %vm264, %v265, %v263
    %v267 = vrsqrt.pop %v245
    %v268 = vmul.f32 %v245, %v267
    %vm269 = vcmp.eq.f32.partialorder %v245, inf
    %v270 = vsel %vm269, %v245, %v268
    %vm271 = vcmp.eq.f32.partialorder %v245, 0.0
    %v272 = vand.u32 %v245, 2147483648
    %v273 = vsel %vm271, %v272, %v270
    %v274 = vsub.f32 %v106, %v110
    %v275 = vsub.f32 %v107, %v111
    %v276 = vsub.f32 %v108, %v112
    %v277 = vsub.f32 %v109, %v113
    %v278 = vadd.f32 %v274, 1e-06
    %v279 = vadd.f32 %v275, 1e-06
    %v280 = vadd.f32 %v276, 1e-06
    %v281 = vadd.f32 %v277, 1e-06
    %v282 = vmul.f32 %v278, %v278
    %v283 = vmul.f32 %v279, %v279
    %v284 = vmul.f32 %v280, %v280
    %v285 = vmul.f32 %v281, %v281
    %286 = vadd.xlane.f32.xlu0 %v282
    %v287 = vpop.xlane.xlu0 %286
    %288 = vadd.xlane.f32.xlu0 %v283
    %v289 = vpop.xlane.xlu0 %288
    %290 = vadd.xlane.f32.xlu0 %v284
    %v291 = vpop.xlane.xlu0 %290
    %292 = vadd.xlane.f32.xlu0 %v285
    %v293 = vpop.xlane.xlu0 %292
    %v294 = vrsqrt.pop %v287
    %v295 = vmul.f32 %v287, %v294
    %vm296 = vcmp.eq.f32.partialorder %v287, inf
    %v297 = vsel %vm296, %v287, %v295
    %vm298 = vcmp.eq.f32.partialorder %v287, 0.0
    %v299 = vand.u32 %v287, 2147483648
    %v300 = vsel %vm298, %v299, %v297
    %v301 = vrsqrt.pop %v289
    %v302 = vmul.f32 %v289, %v301
    %vm303 = vcmp.eq.f32.partialorder %v289, inf
    %v304 = vsel %vm303, %v289, %v302
    %vm305 = vcmp.eq.f32.partialorder %v289, 0.0
    %v306 = vand.u32 %v289, 2147483648
    %v307 = vsel %vm305, %v306, %v304
    %v308 = vrsqrt.pop %v291
    %v309 = vmul.f32 %v291, %v308
    %vm310 = vcmp.eq.f32.partialorder %v291, inf
    %v311 = vsel %vm310, %v291, %v309
    %vm312 = vcmp.eq.f32.partialorder %v291, 0.0
    %v313 = vand.u32 %v291, 2147483648
    %v314 = vsel %vm312, %v313, %v311
    %v315 = vrsqrt.pop %v293
    %v316 = vmul.f32 %v293, %v315
    %vm317 = vcmp.eq.f32.partialorder %v293, inf
    %v318 = vsel %vm317, %v293, %v316
    %vm319 = vcmp.eq.f32.partialorder %v293, 0.0
    %v320 = vand.u32 %v293, 2147483648
    %v321 = vsel %vm319, %v320, %v318
    %v322 = vsub.f32 %v252, %v300
    %v323 = vsub.f32 %v259, %v307
    %v324 = vsub.f32 %v266, %v314
    %v325 = vsub.f32 %v273, %v321
    %v326 = vadd.f32 %v322, 0.4
    %v327 = vadd.f32 %v323, 0.4
    %v328 = vadd.f32 %v324, 0.4
    %v329 = vadd.f32 %v325, 0.4
    %v330 = vmax.f32 %v326, 0.0
    %v331 = vmax.f32 %v327, 0.0
    %v332 = vmax.f32 %v328, 0.0
    %v333 = vmax.f32 %v329, 0.0
    %s334 = sadd.s32 0, 0
    %s335 = smul.u32 %s334, 32
    %v336 = vlaneseq
    %v337 = vshrl.u32 %v336, 7
    %v338 = vadd.s32 %v337, 8
    %v339 = vadd.s32 %v337, 16
    %v340 = vadd.s32 %v337, 24
    %v341 = vstv %s335
    %v342 = vadd.s32 %v341, %v337
    %v343 = vadd.s32 %v341, %v338
    %v344 = vadd.s32 %v341, %v339
    %v345 = vadd.s32 %v341, %v340
    %vm346 = vcmp.lt.s32.totalorder %v342, 32
    %vm347 = vcmp.lt.s32.totalorder %v343, 32
    %vm348 = vcmp.lt.s32.totalorder %v344, 32
    %vm349 = vcmp.lt.s32.totalorder %v345, 32
    %v350 = vadd.f32 %v222, %v330
    %v351 = vadd.f32 %v223, %v331
    %v352 = vadd.f32 %v224, %v332
    %v353 = vadd.f32 %v225, %v333
    %v354 = vsel %vm346, %v350, 0.0
    %v355 = vsel %vm347, %v351, 0.0
    %v356 = vsel %vm348, %v352, 0.0
    %v357 = vsel %vm349, %v353, 0.0
    %v358 = vld [vmem:[#allocation10] sm:$0x1]
    %vm359 = vcmask 7168
    %v360 = vsel %vm359, %v354, 0.0
    %v361 = vsel %vm359, %v355, 0.0
    %v362 = vadd.f32 %v360, %v361
    %v363 = vsel %vm359, %v356, 0.0
    %v364 = vadd.f32 %v362, %v363
    %v365 = vsel %vm359, %v357, 0.0
    %v366 = vadd.f32 %v364, %v365
    %367 = vadd.xlane.f32.xlu0 %v366
    %v368 = vpop.xlane.xlu0 %367
    %v369 = vrot.slane %v368, 4
    %v370 = vadd.f32 %v368, %v369
    %v371 = vrot.slane %v370, 2
    %v372 = vadd.f32 %v370, %v371
    %v373 = vrot.slane %v372, 1
    %v374 = vadd.f32 %v372, %v373
    %s375 = vtos %v374
    %v376 = vstv %s375
    %v377 = vadd.f32 %v358, %v376
    %378 = vst [vmem:[#allocation10] sm:$0x1] %v377
    // Predicated region
    $region38: #{tpu_custom_call.1} parent=1 // pred_check
      _
    $region39: #{tpu_custom_call.1} parent=1 // pred_check_branch
      %380 = sbr.rel (0) target = $region41
    $region40: #{tpu_custom_call.1} parent=1 // pred_region
      %s382 = ssub.s32 16, 16
      %383 = vsyncadd [#allocation4], %s382
      %s385 = sshll.u32 [#allocation10], 4
      %s386 = int_to_ptr.vmem [resolvable:$true] %s385
      %388 = dma.vmem_to_hbm [thread:$0]  %s386, 16, %s4, [#allocation4]
    $region41: #{tpu_custom_call.1} parent=1 // pred_fallthru
      _
    // Predicated region
    $region42: #{tpu_custom_call.1} parent=1 // pred_check
      _
    $region43: #{tpu_custom_call.1} parent=1 // pred_check_branch
      %390 = sbr.rel (0) target = $region45
    $region44: #{tpu_custom_call.1} parent=1 // pred_region
      %391 = dma.done [#allocation4], 16
    $region45: #{tpu_custom_call.1} parent=1 // pred_fallthru
      _
    %392 = vsyncpa [#allocation3], 1
    %393 = vsyncpa [#allocation6], 1
    %394 = vsyncpa [#allocation9], 1
    %395 = vsyncpa [#allocation4], 1

</llo_original>
